<compile_context>
chip_gen: v7x
topology: tpu7x:2x2x1
jax: 0.10.0
libtpu: 0.0.40
codegen_flags: <defaults>
</compile_context>

<pallas_src>
import functools

import jax
import jax.numpy as jnp
from jax.experimental import pallas as pl
from jax.experimental.pallas import tpu as pltpu


def _round_up(x, m):
    return ((x + m - 1) // m) * m


def _centrality_kernel(x_ref, edges_ref, z_ref, out_ref,
                       acc_in_ref, acc_out_ref, *,
                       max_in_degree, max_out_degree):
    blk = x_ref.shape[0]                    # node rows in this block
    e = pl.program_id(1)                    # edge-chunk index (inner, "arbitrary")
    row0 = pl.program_id(0) * blk           # global node id of first row

    # Reset the per-block degree accumulators at the first edge chunk.
    @pl.when(e == 0)
    def _():
        acc_in_ref[...] = jnp.zeros_like(acc_in_ref)
        acc_out_ref[...] = jnp.zeros_like(acc_out_ref)

    src = edges_ref[0:1, :]                 # (1, E_CHUNK) int32 source node ids
    dst = edges_ref[1:2, :]                 # (1, E_CHUNK) int32 destination node ids

    # (blk, 1) node ids; broadcasting inside the compare avoids a (blk, E) iota.
    node_ids = jax.lax.broadcasted_iota(jnp.int32, (blk, 1), 0) + row0

    # Histogram contribution of this edge chunk — pure VPU compare + add.
    acc_in_ref[...] += (dst == node_ids).astype(jnp.int32)    # (blk, E_CHUNK)
    acc_out_ref[...] += (src == node_ids).astype(jnp.int32)   # (blk, E_CHUNK)

    # Finalize: one cross-lane reduce + one MXU matmul + lane-dense store.
    @pl.when(e == pl.num_programs(1) - 1)
    def _():
        in_deg = jnp.minimum(
            jnp.sum(acc_in_ref[...], axis=1, keepdims=True), max_in_degree - 1)
        out_deg = jnp.minimum(
            jnp.sum(acc_out_ref[...], axis=1, keepdims=True), max_out_degree - 1)

        n_tab_pad = z_ref.shape[0]          # 128-padded table rows
        col = jax.lax.broadcasted_iota(jnp.int32, (blk, n_tab_pad), 1)
        # Combined one-hot over [in-degree bins | out-degree bins]; disjoint
        # ranges, so one matmul yields z_in[in_deg] + z_out[out_deg].
        onehot = jnp.logical_or(
            col == in_deg,
            col == out_deg + max_in_degree).astype(jnp.float32)

        emb = jnp.dot(onehot, z_ref[...], preferred_element_type=jnp.float32)
        out_ref[...] = (x_ref[...] + emb).astype(out_ref.dtype)


def centrality_encoding(x, edge_index, z_in, z_out, *,
                        block_rows=None, edge_chunk=None):
    """x: (N, D) f32, edge_index: (2, E) int, z_in: (max_in, D), z_out: (max_out, D)."""
    N, D = x.shape
    max_in = z_in.shape[0]
    max_out = z_out.shape[0]
    E = edge_index.shape[1]

    # ---- node-row tiling: multiple of 8, prefer >= 2 parallel blocks, cap 512.
    if block_rows is None:
        candidates = [b for b in (512, 256, 128, 64, 32, 16, 8)
                      if b <= N and N % b == 0]
        block_rows = next((b for b in candidates if N // b >= 2), None)
        if block_rows is None:
            block_rows = candidates[0] if candidates else N
    assert N % block_rows == 0, "N must be a multiple of block_rows"
    assert block_rows % 8 == 0 or block_rows == N, \
        "block_rows must be a multiple of 8 (or equal to N)"

    # ---- edge-axis tiling: 128-lane-aligned chunks, streamed via the grid.
    if edge_chunk is None:
        edge_chunk = min(1024, _round_up(E, 128))
    assert edge_chunk % 128 == 0, "edge_chunk must be a multiple of 128"
    E_pad = _round_up(E, edge_chunk)

    # Pad edges with sentinel -1 (never matches a node id) for full-lane tiles.
    edges = edge_index.astype(jnp.int32)
    if E_pad != E:
        pad = jnp.full((2, E_pad - E), -1, dtype=jnp.int32)
        edges = jnp.concatenate([edges, pad], axis=1)

    # Pack + zero-pad the embedding table to a full 128-row (K) MXU tile.
    n_tab = max_in + max_out
    n_tab_pad = max(128, _round_up(n_tab, 128))
    z_tab = jnp.concatenate([z_in, z_out], axis=0).astype(jnp.float32)
    if n_tab_pad != n_tab:
        z_tab = jnp.concatenate(
            [z_tab, jnp.zeros((n_tab_pad - n_tab, D), jnp.float32)], axis=0)

    kernel = functools.partial(_centrality_kernel,
                               max_in_degree=max_in, max_out_degree=max_out)

    grid = (N // block_rows, E_pad // edge_chunk)

    return pl.pallas_call(
        kernel,
        out_shape=jax.ShapeDtypeStruct((N, D), x.dtype),
        grid=grid,
        in_specs=[
            pl.BlockSpec((block_rows, D), lambda i, e: (i, 0)),       # x rows
            pl.BlockSpec((2, edge_chunk), lambda i, e: (0, e)),       # edge chunk stream
            pl.BlockSpec((n_tab_pad, D), lambda i, e: (0, 0)),        # packed z table
        ],
        out_specs=pl.BlockSpec((block_rows, D), lambda i, e: (i, 0)),
        scratch_shapes=[
            pltpu.VMEM((block_rows, edge_chunk), jnp.int32),          # in-degree acc
            pltpu.VMEM((block_rows, edge_chunk), jnp.int32),          # out-degree acc
        ],
        compiler_params=pltpu.CompilerParams(
            dimension_semantics=("parallel", "arbitrary")),
    )(x, edges, z_tab)


if __name__ == "__main__":
    key = jax.random.PRNGKey(0)
    N, node_dim = 16, 128
    max_in_degree, max_out_degree = 8, 8

    k_x, k_in, k_out = jax.random.split(key, 3)
    x = jax.random.normal(k_x, (N, node_dim), jnp.float32)
    z_in = jax.random.normal(k_in, (max_in_degree, node_dim), jnp.float32)
    z_out = jax.random.normal(k_out, (max_out_degree, node_dim), jnp.float32)

    # Deterministic edge_index: directed ring in both directions + self loops -> (2, 3N)
    n = jnp.arange(N, dtype=jnp.int32)
    src = jnp.concatenate([n, (n + 1) % N, n])
    dst = jnp.concatenate([(n + 1) % N, n, n])
    edge_index = jnp.stack([src, dst]).astype(jnp.int32)

    out = centrality_encoding(x, edge_index, z_in, z_out)
    jax.block_until_ready(out)

    # Plain-JAX reference of the PyTorch forward for a sanity check.
    in_deg = jnp.minimum(jnp.bincount(edge_index[1], length=N), max_in_degree - 1)
    out_deg = jnp.minimum(jnp.bincount(edge_index[0], length=N), max_out_degree - 1)
    ref = x + z_in[in_deg] + z_out[out_deg]

    assert out.shape == (N, node_dim)
    assert jnp.allclose(out, ref, atol=1e-5), "mismatch vs reference"
    print("KERNEL_OK")
</pallas_src>

<mosaic_0001>
module attributes {stable_mosaic.version = 11 : i64} {
  func.func @_centrality_kernel(%arg0: i32, %arg1: i32, %arg2: memref<8x128xf32, #tpu.memory_space<vmem>>, %arg3: memref<2x128xi32, #tpu.memory_space<vmem>>, %arg4: memref<128x128xf32, #tpu.memory_space<vmem>>, %arg5: memref<8x128xf32, #tpu.memory_space<vmem>>, %arg6: memref<8x128xi32, #tpu.memory_space<vmem>>, %arg7: memref<8x128xi32, #tpu.memory_space<vmem>>) attributes {dimension_semantics = [#tpu.dimension_semantics<parallel>, #tpu.dimension_semantics<arbitrary>], iteration_bounds = array<i64: 2, 1>, scalar_prefetch = 0 : i64, scratch_operands = 2 : i64, tpu.core_type = #tpu.core_type<tc>, window_params = [{transform_indices = @transform_0, window_bounds = array<i64: 8, 128>}, {transform_indices = @transform_1, window_bounds = array<i64: 2, 128>}, {pipeline_mode = #tpu.pipeline_mode<synchronous>, transform_indices = @transform_2, window_bounds = array<i64: 128, 128>}, {transform_indices = @transform_3, window_bounds = array<i64: 8, 128>}]} {
    %c8_i32 = arith.constant 8 : i32
    %0 = arith.muli %arg0, %c8_i32 : i32
    %c0_i32 = arith.constant 0 : i32
    %1 = arith.cmpi eq, %arg1, %c0_i32 : i32
    %2 = arith.extui %1 : i1 to i32
    %c0_i32_0 = arith.constant 0 : i32
    %3 = arith.cmpi ne, %2, %c0_i32_0 : i32
    scf.if %3 {
      %c0_i32_13 = arith.constant 0 : i32
      %26 = vector.broadcast %c0_i32_13 : i32 to vector<8x128xi32>
      %c0_14 = arith.constant 0 : index
      %c0_15 = arith.constant 0 : index
      %27 = vector.load %arg6[%c0_14, %c0_15] : memref<8x128xi32, #tpu.memory_space<vmem>>, vector<8x128xi32>
      tpu.vector_store %arg6[%c0_14, %c0_15], %26 {strides = array<i32>} : memref<8x128xi32, #tpu.memory_space<vmem>>, vector<8x128xi32>,
      %c0_i32_16 = arith.constant 0 : i32
      %28 = vector.broadcast %c0_i32_16 : i32 to vector<8x128xi32>
      %c0_17 = arith.constant 0 : index
      %c0_18 = arith.constant 0 : index
      %29 = vector.load %arg7[%c0_17, %c0_18] : memref<8x128xi32, #tpu.memory_space<vmem>>, vector<8x128xi32>
      tpu.vector_store %arg7[%c0_17, %c0_18], %28 {strides = array<i32>} : memref<8x128xi32, #tpu.memory_space<vmem>>, vector<8x128xi32>,
    } else {
    }
    %c0 = arith.constant 0 : index
    %c0_1 = arith.constant 0 : index
    %4 = vector.load %arg3[%c0, %c0_1] : memref<2x128xi32, #tpu.memory_space<vmem>>, vector<1x128xi32>
    %c1 = arith.constant 1 : index
    %c0_2 = arith.constant 0 : index
    %5 = vector.load %arg3[%c1, %c0_2] : memref<2x128xi32, #tpu.memory_space<vmem>>, vector<1x128xi32>
    %6 = tpu.iota {dimensions = array<i32: 0>} : vector<8x1xi32>
    %7 = vector.broadcast %0 : i32 to vector<8x1xi32>
    %8 = arith.addi %6, %7 : vector<8x1xi32>
    %c0_3 = arith.constant 0 : index
    %c0_4 = arith.constant 0 : index
    %9 = vector.load %arg6[%c0_3, %c0_4] : memref<8x128xi32, #tpu.memory_space<vmem>>, vector<8x128xi32>
    %10 = vector.broadcast %5 : vector<1x128xi32> to vector<8x128xi32>
    %11 = vector.broadcast %8 : vector<8x1xi32> to vector<8x128xi32>
    %12 = arith.cmpi eq, %10, %11 : vector<8x128xi32>
    %13 = arith.extui %12 : vector<8x128xi1> to vector<8x128xi32>
    %14 = arith.addi %9, %13 : vector<8x128xi32>
    %c0_5 = arith.constant 0 : index
    %c0_6 = arith.constant 0 : index
    %15 = vector.load %arg6[%c0_5, %c0_6] : memref<8x128xi32, #tpu.memory_space<vmem>>, vector<8x128xi32>
    tpu.vector_store %arg6[%c0_5, %c0_6], %14 {strides = array<i32>} : memref<8x128xi32, #tpu.memory_space<vmem>>, vector<8x128xi32>,
    %c0_7 = arith.constant 0 : index
    %c0_8 = arith.constant 0 : index
    %16 = vector.load %arg7[%c0_7, %c0_8] : memref<8x128xi32, #tpu.memory_space<vmem>>, vector<8x128xi32>
    %17 = vector.broadcast %4 : vector<1x128xi32> to vector<8x128xi32>
    %18 = vector.broadcast %8 : vector<8x1xi32> to vector<8x128xi32>
    %19 = arith.cmpi eq, %17, %18 : vector<8x128xi32>
    %20 = arith.extui %19 : vector<8x128xi1> to vector<8x128xi32>
    %21 = arith.addi %16, %20 : vector<8x128xi32>
    %c0_9 = arith.constant 0 : index
    %c0_10 = arith.constant 0 : index
    %22 = vector.load %arg7[%c0_9, %c0_10] : memref<8x128xi32, #tpu.memory_space<vmem>>, vector<8x128xi32>
    tpu.vector_store %arg7[%c0_9, %c0_10], %21 {strides = array<i32>} : memref<8x128xi32, #tpu.memory_space<vmem>>, vector<8x128xi32>,
    %c0_i32_11 = arith.constant 0 : i32
    %23 = arith.cmpi eq, %arg1, %c0_i32_11 : i32
    %24 = arith.extui %23 : i1 to i32
    %c0_i32_12 = arith.constant 0 : i32
    %25 = arith.cmpi ne, %24, %c0_i32_12 : i32
    scf.if %25 {
      %c0_13 = arith.constant 0 : index
      %c0_14 = arith.constant 0 : index
      %26 = vector.load %arg6[%c0_13, %c0_14] : memref<8x128xi32, #tpu.memory_space<vmem>>, vector<8x128xi32>
      %cst = arith.constant dense<0> : vector<8xi32>
      %27 = vector.multi_reduction <add>, %26, %cst [1] : vector<8x128xi32> to vector<8xi32>
      %28 = vector.shape_cast %27 : vector<8xi32> to vector<8x1xi32>
      %c7_i32 = arith.constant 7 : i32
      %29 = vector.broadcast %c7_i32 : i32 to vector<8x1xi32>
      %30 = arith.minsi %28, %29 : vector<8x1xi32>
      %c0_15 = arith.constant 0 : index
      %c0_16 = arith.constant 0 : index
      %31 = vector.load %arg7[%c0_15, %c0_16] : memref<8x128xi32, #tpu.memory_space<vmem>>, vector<8x128xi32>
      %cst_17 = arith.constant dense<0> : vector<8xi32>
      %32 = vector.multi_reduction <add>, %31, %cst_17 [1] : vector<8x128xi32> to vector<8xi32>
      %33 = vector.shape_cast %32 : vector<8xi32> to vector<8x1xi32>
      %c7_i32_18 = arith.constant 7 : i32
      %34 = vector.broadcast %c7_i32_18 : i32 to vector<8x1xi32>
      %35 = arith.minsi %33, %34 : vector<8x1xi32>
      %36 = tpu.iota {dimensions = array<i32: 1>} : vector<8x128xi32>
      %37 = vector.broadcast %30 : vector<8x1xi32> to vector<8x128xi32>
      %38 = arith.cmpi eq, %36, %37 : vector<8x128xi32>
      %c8_i32_19 = arith.constant 8 : i32
      %39 = vector.broadcast %c8_i32_19 : i32 to vector<8x1xi32>
      %40 = arith.addi %35, %39 : vector<8x1xi32>
      %41 = vector.broadcast %40 : vector<8x1xi32> to vector<8x128xi32>
      %42 = arith.cmpi eq, %36, %41 : vector<8x128xi32>
      %43 = arith.ori %38, %42 : vector<8x128xi1>
      %44 = arith.extui %43 : vector<8x128xi1> to vector<8x128xi32>
      %45 = arith.sitofp %44 : vector<8x128xi32> to vector<8x128xf32>
      %c0_20 = arith.constant 0 : index
      %c0_21 = arith.constant 0 : index
      %46 = vector.load %arg4[%c0_20, %c0_21] : memref<128x128xf32, #tpu.memory_space<vmem>>, vector<128x128xf32>
      %cst_22 = arith.constant dense<0.000000e+00> : vector<8x128xf32>
      %47 = tpu.matmul %45, %46, %cst_22 {dimension_numbers = #tpu.dot_dimension_numbers<[1], [0], [0], [1], [0, 0, 1, 1], [], []>} : vector<8x128xf32>, vector<128x128xf32>, vector<8x128xf32> -> vector<8x128xf32>
      %c0_23 = arith.constant 0 : index
      %c0_24 = arith.constant 0 : index
      %48 = vector.load %arg2[%c0_23, %c0_24] : memref<8x128xf32, #tpu.memory_space<vmem>>, vector<8x128xf32>
      %49 = arith.addf %48, %47 : vector<8x128xf32>
      %c0_25 = arith.constant 0 : index
      %c0_26 = arith.constant 0 : index
      %50 = vector.load %arg5[%c0_25, %c0_26] : memref<8x128xf32, #tpu.memory_space<vmem>>, vector<8x128xf32>
      tpu.vector_store %arg5[%c0_25, %c0_26], %49 {strides = array<i32>} : memref<8x128xf32, #tpu.memory_space<vmem>>, vector<8x128xf32>,
    } else {
    }
    return
  }
  func.func @transform_0(%arg0: i32, %arg1: i32) -> (i32, i32) {
    %c0_i32 = arith.constant 0 : i32
    %c0_i32_0 = arith.constant 0 : i32
    return %arg0, %c0_i32 : i32, i32
  }
  func.func @transform_1(%arg0: i32, %arg1: i32) -> (i32, i32) {
    %c0_i32 = arith.constant 0 : i32
    %c0_i32_0 = arith.constant 0 : i32
    return %c0_i32, %arg1 : i32, i32
  }
  func.func @transform_2(%arg0: i32, %arg1: i32) -> (i32, i32) {
    %c0_i32 = arith.constant 0 : i32
    %c0_i32_0 = arith.constant 0 : i32
    %c0_i32_1 = arith.constant 0 : i32
    return %c0_i32, %c0_i32_0 : i32, i32
  }
  func.func @transform_3(%arg0: i32, %arg1: i32) -> (i32, i32) {
    %c0_i32 = arith.constant 0 : i32
    %c0_i32_0 = arith.constant 0 : i32
    return %arg0, %c0_i32 : i32, i32
  }
}

</mosaic_0001>

<llo_original>
// kernel: tpu_custom_call.1
$region0: #{tpu_custom_call.1}
  #allocation0 [shape = 'u32[]', space=smem, size = 0x4, offset = 0x4, fixed_abs, tag = 'smem constant byte address 0x4 - core index']
  #allocation1 [shape = 'u32[144,128]{1,0:T(1,128)}', space=vmem, size = 0x12000, scoped, tag = 'internal scratch']
  #allocation2 [shape = 's32[8,128]{1,0:T(8,128)}', space=vmem, size = 0x1000, scoped, tag = 'scratch operand']
  #allocation3 [shape = 's32[8,128]{1,0:T(8,128)}', space=vmem, size = 0x1000, scoped, tag = 'scratch operand']
  %s0 = inlined_call_operand.hbm [shape: f32[16,128], index: 0, kind: input, shape index: {}]
  %s1 = inlined_call_operand.vmem [shape: s32[2,128], index: 1, kind: input, shape index: {}]
  %s2 = inlined_call_operand.hbm [shape: f32[128,128], index: 2, kind: input, shape index: {}]
  %s3 = inlined_call_operand.hbm [shape: f32[16,128], index: 3, kind: output, shape index: {}]
  %s4 = sld [smem:[#allocation0]]
  $region61: #{tpu_custom_call.1} parent=0
    _
  %s6 = ssub.s32 1, %s4
  %s7 = scalar_select 0, %s6, %s4
  $region1: #{tpu_custom_call.1} parent=0
    #allocation4 [shape = 'u8[8192]{0}', space=vmem, size = 0x2000, scoped, tag = 'input window, operand 0']
    #allocation5 [shape = 's32[2]{0}', space=sflag, size = 0x8, scoped, tag = 'scoped memory for tpu_custom_call.1']
    #allocation6 [shape = 's32[2]{0}', space=sflag, size = 0x8, scoped, tag = 'scoped memory for tpu_custom_call.1']
    #allocation7 [shape = 'u8[65536]{0}', space=vmem, size = 0x10000, scoped, tag = 'input window, operand 2, single buffered']
    #allocation8 [shape = 's32[1]{0}', space=sflag, size = 0x4, scoped, tag = 'scoped memory for tpu_custom_call.1']
    #allocation9 [shape = 'u8[8192]{0}', space=vmem, size = 0x2000, scoped, tag = 'output window, operand 0']
    %8 = vsyncpa [#allocation5], 0
    %s9 = scalar_lea.sflag [#allocation5], 1
    %10 = vsyncpa %s9, 0
    %11 = vsyncpa [#allocation8], 0
    %12 = vsyncpa [#allocation6], 0
    %s13 = scalar_lea.sflag [#allocation6], 1
    %14 = vsyncpa %s13, 0
    loop: start=0, step=1, limit=4
    $region2: #{tpu_custom_call.1} parent=1 // loop_pre_header
      _
    $region3: #{tpu_custom_call.1} parent=1 // loop_header
      %s16 = sphi 0, %s20
      %p17 = scmp.ge.s32.totalorder %s16, 4
      %s23 = sphi 0, %s35
      %s24 = sphi 0, %s31
      %s25 = sphi 0, %s23
      %s26 = sphi 0, %s24
      %s27 = sphi 0, %s25
      %s28 = sphi 0, %s26
      %s38 = sphi 0, %s40
      %s41 = sphi 0, %s38
      %s42 = sphi 0, %s41
      %s58 = sphi 0, %s42
      %s64 = sphi 0, %s66
      %s67 = sphi 0, %s64
      %s68 = sphi 0, %s67
      %s84 = sphi 0, %s68
      %s88 = sphi 0, %s88
      %s90 = sphi 0, %s88
      %s91 = sphi 0, %s90
      %s105 = sphi 0, %s91
      %s111 = sphi 0, %s113
      %s114 = sphi 0, %s111
      %s115 = sphi 0, %s114
      %s131 = sphi 0, %s115
    $region4: #{tpu_custom_call.1} parent=1 // loop_header_branch
      %19 = sbr.rel (%p17) target = $region8
    $region5: #{tpu_custom_call.1} parent=1 // loop_body
      %s21 = ssub.s32 %s16, 1
      %s22 = ssub.s32 %s16, 2
      %s29 = sadd.s32 1, %s24
      %p30 = scmp.ge.s32.totalorder %s29, 1
      %s31 = scalar_select %p30, 0, %s29
      %s32 = sadd.s32 1, %s23
      %s33 = scalar_select %p30, %s32, %s23
      %p34 = scmp.ge.s32.totalorder %s33, 2
      %s35 = scalar_select %p34, 0, %s33
      %s36 = ssub.s32 %s23, %s35
      %p37 = scmp.eq.s32.totalorder %s36, 0
      %s39 = sadd.s32 %s38, 1
      %s40 = scalar_select %p37, %s38, %s39
      %p43 = pneg %p37
      %p44 = scmp.eq.s32.totalorder %s16, 1
      %p45 = por %p43, %p44
      %p46 = scmp.ne.s32.totalorder %s38, %s41
      %p47 = scmp.eq.s32.totalorder %s16, 0
      %p48 = por %p46, %p47
      %p49 = scmp.ne.s32.totalorder %s38, %s41
      %p50 = scmp.eq.s32.totalorder %s21, 1
      %p51 = por %p49, %p50
      %p52 = scmp.ne.s32.totalorder %s41, %s42
      %p53 = scmp.eq.s32.totalorder %s21, 0
      %p54 = por %p52, %p53
      %p55 = scmp.ne.s32.totalorder %s41, %s42
      %p56 = scmp.eq.s32.totalorder %s22, 1
      %p57 = por %p55, %p56
      %p59 = scmp.ne.s32.totalorder %s42, %s58
      %p60 = scmp.eq.s32.totalorder %s22, 0
      %p61 = por %p59, %p60
      %s62 = ssub.s32 %s24, %s31
      %p63 = scmp.eq.s32.totalorder %s62, 0
      %s65 = sadd.s32 %s64, 1
      %s66 = scalar_select %p63, %s64, %s65
      %p69 = pneg %p63
      %p70 = scmp.eq.s32.totalorder %s16, 1
      %p71 = por %p69, %p70
      %p72 = scmp.ne.s32.totalorder %s64, %s67
      %p73 = scmp.eq.s32.totalorder %s16, 0
      %p74 = por %p72, %p73
      %p75 = scmp.ne.s32.totalorder %s64, %s67
      %p76 = scmp.eq.s32.totalorder %s21, 1
      %p77 = por %p75, %p76
      %p78 = scmp.ne.s32.totalorder %s67, %s68
      %p79 = scmp.eq.s32.totalorder %s21, 0
      %p80 = por %p78, %p79
      %p81 = scmp.ne.s32.totalorder %s67, %s68
      %p82 = scmp.eq.s32.totalorder %s22, 1
      %p83 = por %p81, %p82
      %p85 = scmp.ne.s32.totalorder %s68, %s84
      %p86 = scmp.eq.s32.totalorder %s22, 0
      %p87 = por %p85, %p86
      %s89 = sadd.s32 %s88, 1
      %p92 = scmp.eq.s32.totalorder %s16, 1
      %p93 = scmp.ne.s32.totalorder %s88, %s90
      %p94 = scmp.eq.s32.totalorder %s16, 0
      %p95 = por %p93, %p94
      %p96 = scmp.ne.s32.totalorder %s88, %s90
      %p97 = scmp.eq.s32.totalorder %s21, 1
      %p98 = por %p96, %p97
      %p99 = scmp.ne.s32.totalorder %s90, %s91
      %p100 = scmp.eq.s32.totalorder %s21, 0
      %p101 = por %p99, %p100
      %p102 = scmp.ne.s32.totalorder %s90, %s91
      %p103 = scmp.eq.s32.totalorder %s22, 1
      %p104 = por %p102, %p103
      %p106 = scmp.ne.s32.totalorder %s91, %s105
      %p107 = scmp.eq.s32.totalorder %s22, 0
      %p108 = por %p106, %p107
      %s109 = ssub.s32 %s23, %s35
      %p110 = scmp.eq.s32.totalorder %s109, 0
      %s112 = sadd.s32 %s111, 1
      %s113 = scalar_select %p110, %s111, %s112
      %p116 = pneg %p110
      %p117 = scmp.eq.s32.totalorder %s16, 1
      %p118 = por %p116, %p117
      %p119 = scmp.ne.s32.totalorder %s111, %s114
      %p120 = scmp.eq.s32.totalorder %s16, 0
      %p121 = por %p119, %p120
      %p122 = scmp.ne.s32.totalorder %s111, %s114
      %p123 = scmp.eq.s32.totalorder %s21, 1
      %p124 = por %p122, %p123
      %p125 = scmp.ne.s32.totalorder %s114, %s115
      %p126 = scmp.eq.s32.totalorder %s21, 0
      %p127 = por %p125, %p126
      %p128 = scmp.ne.s32.totalorder %s114, %s115
      %p129 = scmp.eq.s32.totalorder %s22, 1
      %p130 = por %p128, %p129
      %p132 = scmp.ne.s32.totalorder %s115, %s131
      %p133 = scmp.eq.s32.totalorder %s22, 0
      %p134 = por %p132, %p133
      %p135 = scmp.le.s32.totalorder 1, %s16
      %p136 = scmp.lt.s32.totalorder %s16, 3
      %p137 = pnand %p135, %p136
      %p138 = pneg %p137
      // Predicated region
      $region9: #{tpu_custom_call.1} parent=5 // pred_check
        _
      $region10: #{tpu_custom_call.1} parent=5 // pred_check_branch
        %140 = sbr.rel (%p137) target = $region12
      $region11: #{tpu_custom_call.1} parent=5 // pred_region
        %s141 = ssub.s32 %s16, 1
        // Predicated region
        $region13: #{tpu_custom_call.1} parent=11 // pred_check
          %p142 = pneg %p80
        $region14: #{tpu_custom_call.1} parent=11 // pred_check_branch
          %144 = sbr.rel (%p142) target = $region16
        $region15: #{tpu_custom_call.1} parent=11 // pred_region
          %p145 = scmp.lt.s32.totalorder %s26, 0
          %s146 = scalar_select %p145, %s26, 0
          %s147 = smul.addr %s146, 2
          %s148 = scalar_lea.vmem %s1, %s147
        $region16: #{tpu_custom_call.1} parent=11 // pred_fallthru
          _
        // Predicated region
        $region17: #{tpu_custom_call.1} parent=11 // pred_check
          %p149 = pneg %p101
        $region18: #{tpu_custom_call.1} parent=11 // pred_check_branch
          %151 = sbr.rel (%p149) target = $region20
        $region19: #{tpu_custom_call.1} parent=11 // pred_region
          %s153 = ssub.s32 2048, 2048
          %154 = vsyncadd [#allocation8], %s153
          %s155 = sshll.u32 [#allocation7], 4
          %s156 = int_to_ptr.vmem [resolvable:$true] %s155
          %161 = dma.hbm_to_vmem [thread:$0]  %s2, 2048, %s156, [#allocation8], 128, 128, 8
        $region20: #{tpu_custom_call.1} parent=11 // pred_fallthru
          _
      $region12: #{tpu_custom_call.1} parent=5 // pred_fallthru
        _
      %p162 = scmp.lt.s32.totalorder %s16, 2
      // Predicated region
      $region21: #{tpu_custom_call.1} parent=5 // pred_check
        %p163 = pneg %p162
      $region22: #{tpu_custom_call.1} parent=5 // pred_check_branch
        %165 = sbr.rel (%p163) target = $region24
      $region23: #{tpu_custom_call.1} parent=5 // pred_region
        // Predicated region
        $region25: #{tpu_custom_call.1} parent=23 // pred_check
          %p166 = pneg %p48
        $region26: #{tpu_custom_call.1} parent=23 // pred_check_branch
          %168 = sbr.rel (%p166) target = $region28
        $region27: #{tpu_custom_call.1} parent=23 // pred_region
          %s169 = sand.u32 %s38, 1
          %s170 = scalar_lea.sflag [#allocation5], %s169
          %s171 = sand.u32 %s38, 1
          %s172 = smul.addr %s171, 8
          %s173 = scalar_lea.vmem [#allocation4], %s172
          %s175 = ssub.s32 128, 128
          %176 = vsyncadd %s170, %s175
          %s177 = smul.addr %s23, 128
          %s178 = scalar_lea.hbm %s0, %s177
          %s180 = sshll.u32 %s173, 4
          %s181 = int_to_ptr.vmem [resolvable:$true] %s180
          %183 = dma.hbm_to_vmem [thread:$0]  %s178, 128, %s181, %s170
        $region28: #{tpu_custom_call.1} parent=23 // pred_fallthru
          _
      $region24: #{tpu_custom_call.1} parent=5 // pred_fallthru
        _
      %p184 = scmp.le.s32.totalorder 1, %s16
      %p185 = scmp.lt.s32.totalorder %s16, 3
      %p186 = pnand %p184, %p185
      %p187 = pneg %p186
      // Predicated region
      $region29: #{tpu_custom_call.1} parent=5 // pred_check
        _
      $region30: #{tpu_custom_call.1} parent=5 // pred_check_branch
        %189 = sbr.rel (%p186) target = $region32
      $region31: #{tpu_custom_call.1} parent=5 // pred_region
        %s190 = ssub.s32 %s16, 1
        %s191 = sand.u32 %s41, 1
        %s192 = scalar_lea.sflag [#allocation5], %s191
        %s193 = sand.u32 %s41, 1
        %s194 = smul.addr %s193, 8
        %s195 = scalar_lea.vmem [#allocation4], %s194
        // Predicated region
        $region33: #{tpu_custom_call.1} parent=31 // pred_check
          %p196 = pneg %p54
        $region34: #{tpu_custom_call.1} parent=31 // pred_check_branch
          %198 = sbr.rel (%p196) target = $region36
        $region35: #{tpu_custom_call.1} parent=31 // pred_region
          %199 = dma.done %s192, 128
        $region36: #{tpu_custom_call.1} parent=31 // pred_fallthru
          _
        // Predicated region
        $region37: #{tpu_custom_call.1} parent=31 // pred_check
          %p200 = pneg %p101
        $region38: #{tpu_custom_call.1} parent=31 // pred_check_branch
          %202 = sbr.rel (%p200) target = $region40
        $region39: #{tpu_custom_call.1} parent=31 // pred_region
          %203 = dma.done [#allocation8], 2048
        $region40: #{tpu_custom_call.1} parent=31 // pred_fallthru
          _
        %s204 = sand.u32 %s41, 1
        %s205 = scalar_lea.sflag [#allocation5], %s204
        %s206 = sand.u32 %s41, 1
        %s207 = smul.addr %s206, 8
        %s208 = scalar_lea.vmem [#allocation4], %s207
        %p209 = pneg %p54
        %p210 = pneg %p51
        %p211 = scmp.lt.s32.totalorder %s26, 0
        %s212 = scalar_select %p211, %s26, 0
        %s213 = smul.addr %s212, 2
        %s214 = scalar_lea.vmem %s1, %s213
        %p215 = pneg %p80
        %p216 = pneg %p77
        %p217 = pneg %p101
        %p218 = pneg %p98
        %p219 = pneg %p127
        %p220 = pneg %p124
        %s221 = sand.u32 %s114, 1
        %s222 = scalar_lea.sflag [#allocation6], %s221
        %s223 = sand.u32 %s114, 1
        %s224 = smul.addr %s223, 8
        %s225 = scalar_lea.vmem [#allocation9], %s224
        %p226 = scmp.lt.s32.totalorder %s26, 0
        %s227 = scalar_select %p226, %s26, 0
        %s228 = smul.addr %s227, 2
        %s229 = scalar_lea.vmem %s1, %s228
        %s230 = smul.u32 %s25, 8
        %p231 = scmp.eq.s32.totalorder %s26, 0
        // Predicated region
        $region41: #{tpu_custom_call.1} parent=31 // pred_check
          %p232 = pneg %p231
        $region42: #{tpu_custom_call.1} parent=31 // pred_check_branch
          %234 = sbr.rel (%p232) target = $region44
        $region43: #{tpu_custom_call.1} parent=31 // pred_region
          %235 = vst [vmem:[#allocation2] sm:$0xff] 0
          %236 = vst [vmem:[#allocation3] sm:$0xff] 0
        $region44: #{tpu_custom_call.1} parent=31 // pred_fallthru
          _
        %v237 = vld [vmem:[%s229] sm:$0x1]
        %v238 = vld [vmem:[%s229 + $0x1] sm:$0x1]
        %v239 = vlaneseq
        %v240 = vshrl.u32 %v239, 7
        %v241 = vstv %s230
        %v242 = vadd.s32 %v240, %v241
        %v243 = vld [vmem:[#allocation2] sm:$0xff]
        %v244 = vlaneseq
        %v245 = vshrl.u32 %v244, 7
        %v246 = vsub.s32 0, %v245
        %v247 = vrot.slane %v238, %v246
        %vm248 = vcmp.eq.s32.totalorder %v247, %v242
        %v249 = vsel %vm248, 1, 0
        %v250 = vadd.s32 %v243, %v249
        %251 = vst [vmem:[#allocation2] sm:$0xff] %v250
        %v252 = vld [vmem:[#allocation3] sm:$0xff]
        %v253 = vlaneseq
        %v254 = vshrl.u32 %v253, 7
        %v255 = vsub.s32 0, %v254
        %v256 = vrot.slane %v237, %v255
        %vm257 = vcmp.eq.s32.totalorder %v256, %v242
        %v258 = vsel %vm257, 1, 0
        %v259 = vadd.s32 %v252, %v258
        %260 = vst [vmem:[#allocation3] sm:$0xff] %v259
        // Predicated region
        $region45: #{tpu_custom_call.1} parent=31 // pred_check
          %p261 = pneg %p231
        $region46: #{tpu_custom_call.1} parent=31 // pred_check_branch
          %263 = sbr.rel (%p261) target = $region48
        $region47: #{tpu_custom_call.1} parent=31 // pred_region
          %v264 = vld [vmem:[#allocation2] sm:$0xff]
          %v265 = vand.u32 %v264, 65535
          %v266 = vshrl.u32 %v264, 16
          %v267 = vcvt.s32.f32 %v265
          %v268 = vcvt.s32.f32 %v266
          %269 = vadd.xlane.f32.xlu0 %v267
          %v270 = vpop.xlane.xlu0 %269
          %271 = vadd.xlane.f32.xlu0 %v268
          %v272 = vpop.xlane.xlu0 %271
          %v273 = vcvt.f32.s32 %v270
          %v274 = vcvt.f32.s32 %v272
          %v275 = vshll.u32 %v274, 16
          %v276 = vadd.s32 %v275, %v273
          %vm277 = vcmp.lt.s32.totalorder %v276, 7
          %v278 = vsel %vm277, %v276, 7
          %v279 = vld [vmem:[#allocation3] sm:$0xff]
          %v280 = vand.u32 %v279, 65535
          %v281 = vshrl.u32 %v279, 16
          %v282 = vcvt.s32.f32 %v280
          %v283 = vcvt.s32.f32 %v281
          %284 = vadd.xlane.f32.xlu0 %v282
          %v285 = vpop.xlane.xlu0 %284
          %286 = vadd.xlane.f32.xlu0 %v283
          %v287 = vpop.xlane.xlu0 %286
          %v288 = vcvt.f32.s32 %v285
          %v289 = vcvt.f32.s32 %v287
          %v290 = vshll.u32 %v289, 16
          %v291 = vadd.s32 %v290, %v288
          %vm292 = vcmp.lt.s32.totalorder %v291, 7
          %v293 = vsel %vm292, %v291, 7
          %v294 = vlaneseq
          %v295 = vand.u32 %v294, 127
          %vm296 = vcmp.eq.s32.totalorder %v295, %v278
          %v297 = vadd.s32 %v293, 8
          %vm298 = vcmp.eq.s32.totalorder %v295, %v297
          %vm299 = vmor %vm296, %vm298
          %v300 = vsel %vm299, 1, 0
          %v301 = vcvt.s32.f32 %v300
          %v302 = vld [vmem:[#allocation7] sm:$0xff]
          %v303 = vld [vmem:[#allocation7 + $0x8] sm:$0xff]
          %v304 = vld [vmem:[#allocation7 + $0x10] sm:$0xff]
          %v305 = vld [vmem:[#allocation7 + $0x18] sm:$0xff]
          %v306 = vld [vmem:[#allocation7 + $0x20] sm:$0xff]
          %v307 = vld [vmem:[#allocation7 + $0x28] sm:$0xff]
          %v308 = vld [vmem:[#allocation7 + $0x30] sm:$0xff]
          %v309 = vld [vmem:[#allocation7 + $0x38] sm:$0xff]
          %v310 = vld [vmem:[#allocation7 + $0x40] sm:$0xff]
          %v311 = vld [vmem:[#allocation7 + $0x48] sm:$0xff]
          %v312 = vld [vmem:[#allocation7 + $0x50] sm:$0xff]
          %v313 = vld [vmem:[#allocation7 + $0x58] sm:$0xff]
          %v314 = vld [vmem:[#allocation7 + $0x60] sm:$0xff]
          %v315 = vld [vmem:[#allocation7 + $0x68] sm:$0xff]
          %v316 = vld [vmem:[#allocation7 + $0x70] sm:$0xff]
          %v317 = vld [vmem:[#allocation7 + $0x78] sm:$0xff]
          %318 = vmatprep.subr.mxu0 0.0
          %319 = vmatpush1.msra.mxu0 %v302
          %320 = vmatprep.subr.mxu0 0.0
          %321 = vmatpush1.msra.mxu0 %v303
          %322 = vmatprep.subr.mxu0 0.0
          %323 = vmatpush1.msra.mxu0 %v304
          %324 = vmatprep.subr.mxu0 0.0
          %325 = vmatpush1.msra.mxu0 %v305
          %326 = vmatprep.subr.mxu0 0.0
          %327 = vmatpush1.msra.mxu0 %v306
          %328 = vmatprep.subr.mxu0 0.0
          %329 = vmatpush1.msra.mxu0 %v307
          %330 = vmatprep.subr.mxu0 0.0
          %331 = vmatpush1.msra.mxu0 %v308
          %332 = vmatprep.subr.mxu0 0.0
          %333 = vmatpush1.msra.mxu0 %v309
          %334 = vmatprep.subr.mxu0 0.0
          %335 = vmatpush1.msra.mxu0 %v310
          %336 = vmatprep.subr.mxu0 0.0
          %337 = vmatpush1.msra.mxu0 %v311
          %338 = vmatprep.subr.mxu0 0.0
          %339 = vmatpush1.msra.mxu0 %v312
          %340 = vmatprep.subr.mxu0 0.0
          %341 = vmatpush1.msra.mxu0 %v313
          %342 = vmatprep.subr.mxu0 0.0
          %343 = vmatpush1.msra.mxu0 %v314
          %344 = vmatprep.subr.mxu0 0.0
          %345 = vmatpush1.msra.mxu0 %v315
          %346 = vmatprep.subr.mxu0 0.0
          %347 = vmatpush1.msra.mxu0 %v316
          %348 = vmatprep.subr.mxu0 0.0
          %349 = vmatpush1.msra.mxu0 %v317
          %350 = vmatprep.subr.mxu0 0.0
          %351 = vmatpush1.msra.mxu0 0.0
          %352 = vmatprep.subr.mxu0 0.0
          %353 = vmatpush1.msra.mxu0 0.0
          %354 = vmatprep.subr.mxu0 0.0
          %355 = vmatpush1.msra.mxu0 0.0
          %356 = vmatprep.subr.mxu0 0.0
          %357 = vmatpush1.msra.mxu0 0.0
          %358 = vmatprep.subr.mxu0 0.0
          %359 = vmatpush1.msra.mxu0 0.0
          %360 = vmatprep.subr.mxu0 0.0
          %361 = vmatpush1.msra.mxu0 0.0
          %362 = vmatprep.subr.mxu0 0.0
          %363 = vmatpush1.msra.mxu0 0.0
          %364 = vmatprep.subr.mxu0 0.0
          %365 = vmatpush1.msra.mxu0 0.0
          %366 = vmatprep.subr.mxu0 0.0
          %367 = vmatpush1.msra.mxu0 0.0
          %368 = vmatprep.subr.mxu0 0.0
          %369 = vmatpush1.msra.mxu0 0.0
          %370 = vmatprep.subr.mxu0 0.0
          %371 = vmatpush1.msra.mxu0 0.0
          %372 = vmatprep.subr.mxu0 0.0
          %373 = vmatpush1.msra.mxu0 0.0
          %374 = vmatprep.subr.mxu0 0.0
          %375 = vmatpush1.msra.mxu0 0.0
          %376 = vmatprep.subr.mxu0 0.0
          %377 = vmatpush1.msra.mxu0 0.0
          %378 = vmatprep.subr.mxu0 0.0
          %379 = vmatpush1.msra.mxu0 0.0
          %380 = vmatprep.subr.mxu0 0.0
          %381 = vmatpush1.msra.mxu0 0.0
          %382 = vmatprep.mubr.f32.mxu0 0.0
          %383 = vmatmul.mubr.f32.gmra.mrb[0].mxu0 %v301
          %v384 = vpop.f32.mrb[0].mxu0
          %v385 = vadd.f32 0.0, %v384
          %v386 = vpop.f32.mrb[0].mxu0
          %387 = vdwg.mxu0
          %v388 = vld [vmem:[%s195] sm:$0xff]
          %v389 = vadd.f32 %v388, %v385
          %390 = vst [vmem:[%s225] sm:$0xff] %v389
        $region48: #{tpu_custom_call.1} parent=31 // pred_fallthru
          _
        %s391 = sand.u32 %s114, 1
        %s392 = scalar_lea.sflag [#allocation6], %s391
        %s393 = sand.u32 %s114, 1
        %s394 = smul.addr %s393, 8
        %s395 = scalar_lea.vmem [#allocation9], %s394
        // Predicated region
        $region49: #{tpu_custom_call.1} parent=31 // pred_check
          %p396 = pneg %p124
        $region50: #{tpu_custom_call.1} parent=31 // pred_check_branch
          %398 = sbr.rel (%p396) target = $region52
        $region51: #{tpu_custom_call.1} parent=31 // pred_region
          %s400 = ssub.s32 128, 128
          %401 = vsyncadd %s392, %s400
          %s402 = smul.addr %s25, 128
          %s403 = scalar_lea.hbm %s3, %s402
          %s405 = sshll.u32 %s395, 4
          %s406 = int_to_ptr.vmem [resolvable:$true] %s405
          %408 = dma.vmem_to_hbm [thread:$0]  %s406, 128, %s403, %s392
        $region52: #{tpu_custom_call.1} parent=31 // pred_fallthru
          _
      $region32: #{tpu_custom_call.1} parent=5 // pred_fallthru
        _
      %p409 = scmp.le.s32.totalorder 2, %s16
      // Predicated region
      $region53: #{tpu_custom_call.1} parent=5 // pred_check
        %p410 = pneg %p409
      $region54: #{tpu_custom_call.1} parent=5 // pred_check_branch
        %412 = sbr.rel (%p410) target = $region56
      $region55: #{tpu_custom_call.1} parent=5 // pred_region
        %s413 = ssub.s32 %s16, 2
        // Predicated region
        $region57: #{tpu_custom_call.1} parent=55 // pred_check
          %p414 = pneg %p130
        $region58: #{tpu_custom_call.1} parent=55 // pred_check_branch
          %416 = sbr.rel (%p414) target = $region60
        $region59: #{tpu_custom_call.1} parent=55 // pred_region
          %s417 = sand.u32 %s115, 1
          %s418 = scalar_lea.sflag [#allocation6], %s417
          %s419 = sand.u32 %s115, 1
          %s420 = smul.addr %s419, 8
          %s421 = scalar_lea.vmem [#allocation9], %s420
          %422 = dma.done %s418, 128
        $region60: #{tpu_custom_call.1} parent=55 // pred_fallthru
          _
      $region56: #{tpu_custom_call.1} parent=5 // pred_fallthru
        _
    $region6: #{tpu_custom_call.1} parent=1 // loop_footer
      %s20 = sadd.s32 1, %s16
    $region7: #{tpu_custom_call.1} parent=1 // loop_footer_branch
      %15 = sbr.rel target = $region3
    $region8: #{tpu_custom_call.1} parent=1 // loop_exit
      _
    %423 = vsyncpa [#allocation5], 1
    %s424 = scalar_lea.sflag [#allocation5], 1
    %425 = vsyncpa %s424, 1
    %426 = vsyncpa [#allocation8], 1
    %427 = vsyncpa [#allocation6], 1
    %s428 = scalar_lea.sflag [#allocation6], 1
    %429 = vsyncpa %s428, 1

</llo_original>
